<compile_context>
chip_gen: v7x
topology: tpu7x:2x2x1
jax: 0.10.0
libtpu: 0.0.40
codegen_flags: <defaults>
</compile_context>

<pallas_src>
import functools

import jax
import jax.numpy as jnp
from jax import lax
from jax.experimental import pallas as pl
from jax.experimental.pallas import tpu as pltpu


def _round_up(x, m):
    return ((x + m - 1) // m) * m


def _center_loss_kernel(batch, padded_batch, block_b, tiles_per_split,
                        num_classes, labels_ref, x_ref, c_ref, out_ref,
                        gath_ref, acc_ref):
    # labels_ref: (B_pad,) int32 SMEM (scalar prefetch)
    # x_ref:      (block_b, D)   VMEM -- one batch tile of x (native dtype)
    # c_ref:      (C, D)         VMEM -- full centers table, resident
    # out_ref:    (1, 1) f32     VMEM -- per-core-split partial sum
    # gath_ref:   (block_b, D) f32 VMEM scratch -- gathered centers rows
    # acc_ref:    (1, 1) f32     VMEM scratch -- running sum over tiles
    c = pl.program_id(0)          # core-split index ("parallel")
    t = pl.program_id(1)          # batch-tile index ("arbitrary" reduction)

    @pl.when(t == 0)
    def _():
        acc_ref[...] = jnp.zeros_like(acc_ref)

    base = (c * tiles_per_split + t) * block_b

    # Gather the block_b needed center rows into a dense f32 scratch.  One
    # masked row copy per sample; all heavy math below is full-vreg work.
    @pl.loop(0, block_b)
    def _(r):
        lbl = labels_ref[base + r]
        # Defensive clamp: an out-of-range label would otherwise read
        # arbitrary VMEM (VMEM refs have no bounds check).
        lbl = jnp.minimum(jnp.maximum(lbl, 0), num_classes - 1)
        gath_ref[pl.ds(r, 1), :] = c_ref[pl.ds(lbl, 1), :].astype(jnp.float32)

    xf = x_ref[...].astype(jnp.float32)                  # (block_b, D)
    diff = xf - gath_ref[...]
    d = jnp.sum(diff * diff, axis=1, keepdims=True)      # (block_b, 1)
    d = jnp.clip(d, 1e-12, 1e12)

    # Mask rows added by padding the batch up to a multiple of block_b.
    if padded_batch != batch:
        rows = base + lax.broadcasted_iota(jnp.int32, (block_b, 1), 0)
        d = jnp.where(rows < batch, d, 0.0)

    # Single accumulator RMW per tile.
    acc_ref[...] += jnp.sum(d, axis=0, keepdims=True)

    @pl.when(t == tiles_per_split - 1)
    def _():
        out_ref[...] = acc_ref[...]


def center_loss(x, centers, labels, *, block_b=128, num_core_splits=1):
    """x: (B, D), centers: (C, D), labels: (B,) int -> scalar f32 loss.

    block_b: batch-tile size (rounded to a multiple of 8).
    num_core_splits: set to 2 on v7x to split the reduction across both
      TensorCores (also correct, just sequential, on v5e/v6e).
    """
    B, D = x.shape
    C, Dc = centers.shape
    assert D == Dc

    labels_i32 = labels.astype(jnp.int32)

    # Effective tile: multiple of 8, no larger than the (rounded-up) batch.
    block_b = max(8, (block_b // 8) * 8)
    tb = min(block_b, _round_up(B, 8))
    tb = max(8, (tb // 8) * 8)

    num_tiles = _round_up(pl.cdiv(B, tb), num_core_splits)
    tiles_per_split = num_tiles // num_core_splits
    b_pad = num_tiles * tb

    if b_pad != B:
        x = jnp.pad(x, ((0, b_pad - B), (0, 0)))
        labels_i32 = jnp.pad(labels_i32, (0, b_pad - B))

    kernel = functools.partial(_center_loss_kernel, B, b_pad, tb,
                               tiles_per_split, C)

    # VMEM budget: (possibly double-buffered) resident centers + double-
    # buffered x tile + f32 gather scratch.  Raise the scoped limit only when
    # the default (16/32 MiB on v5e/v6e, 32 MiB on v7x) would be exceeded.
    est = (2 * C * D * centers.dtype.itemsize
           + 2 * tb * D * x.dtype.itemsize
           + tb * D * 4 + 4096)
    cp_kwargs = dict(dimension_semantics=("parallel", "arbitrary"))
    if est > (24 << 20):
        cp_kwargs["vmem_limit_bytes"] = min(int(est * 1.25), 100 << 20)
    # TODO(synk): for centers tables too large for VMEM (C*D*4 beyond ~48 MiB
    # on v7x), switch centers to memory_space=pl.ANY and batch-DMA-gather the
    # tb rows per tile (double-buffered) instead of keeping them resident.

    out = pl.pallas_call(
        kernel,
        out_shape=jax.ShapeDtypeStruct((num_core_splits, 1), jnp.float32),
        grid_spec=pltpu.PrefetchScalarGridSpec(
            num_scalar_prefetch=1,               # labels -> SMEM
            grid=(num_core_splits, tiles_per_split),
            in_specs=[
                # x: one batch tile per step.
                pl.BlockSpec((tb, D),
                             lambda c, t, lbl: (c * tiles_per_split + t, 0)),
                # centers: constant block index => loaded once, kept resident.
                pl.BlockSpec((C, D), lambda c, t, lbl: (0, 0)),
            ],
            out_specs=pl.BlockSpec((1, 1), lambda c, t, lbl: (c, 0)),
            scratch_shapes=[
                pltpu.VMEM((tb, D), jnp.float32),   # gathered center rows
                pltpu.VMEM((1, 1), jnp.float32),    # running sum
            ],
        ),
        compiler_params=pltpu.CompilerParams(**cp_kwargs),
    )(labels_i32, x, centers)

    return jnp.sum(out) / B


def center_loss_ref(x, centers, labels):
    """Pure-JAX reference mirroring the PyTorch forward (expanded form)."""
    B = x.shape[0]
    C = centers.shape[0]
    distmat = (jnp.sum(x ** 2, axis=1, keepdims=True)
               + jnp.sum(centers ** 2, axis=1, keepdims=True).T
               - 2.0 * x @ centers.T)
    mask = labels[:, None] == jnp.arange(C)[None, :]
    sel = jnp.where(mask, jnp.clip(distmat, 1e-12, 1e12), 0.0)
    return jnp.sum(sel) / B


if __name__ == "__main__":
    # Small shapes; batch=24 with block_b=16 exercises multi-tile accumulation
    # and the padded-row masking path.
    batch, feat_dim, num_classes = 24, 128, 16

    key = jax.random.PRNGKey(0)
    k_x, k_c, k_l = jax.random.split(key, 3)

    x = jax.random.normal(k_x, (batch, feat_dim), dtype=jnp.float32)
    # Deterministic "parameter" init, mirroring torch.randn(num_classes, feat_dim).
    centers = jax.random.normal(k_c, (num_classes, feat_dim), dtype=jnp.float32)
    labels = jax.random.randint(k_l, (batch,), 0, num_classes, dtype=jnp.int32)

    loss = center_loss(x, centers, labels, block_b=16, num_core_splits=1)
    jax.block_until_ready(loss)

    ref = center_loss_ref(x, centers, labels)
    assert jnp.allclose(loss, ref, rtol=1e-5, atol=1e-4), (loss, ref)

    print("KERNEL_OK")
</pallas_src>

<mosaic_0001>
module attributes {stable_mosaic.version = 11 : i64} {
  func.func @_center_loss_kernel(%arg0: i32, %arg1: i32, %arg2: memref<32xi32, #tpu.memory_space<smem>>, %arg3: memref<16x128xf32, #tpu.memory_space<vmem>>, %arg4: memref<16x128xf32, #tpu.memory_space<vmem>>, %arg5: memref<1x1xf32, #tpu.memory_space<vmem>>, %arg6: memref<16x128xf32, #tpu.memory_space<vmem>>, %arg7: memref<1x1xf32, #tpu.memory_space<vmem>>) attributes {dimension_semantics = [#tpu.dimension_semantics<parallel>, #tpu.dimension_semantics<arbitrary>], iteration_bounds = array<i64: 1, 2>, scalar_prefetch = 1 : i64, scratch_operands = 2 : i64, tpu.core_type = #tpu.core_type<tc>, window_params = [{transform_indices = @transform_0, window_bounds = array<i64: 16, 128>}, {pipeline_mode = #tpu.pipeline_mode<synchronous>, transform_indices = @transform_1, window_bounds = array<i64: 16, 128>}, {transform_indices = @transform_2, window_bounds = array<i64: 1, 1>}]} {
    %c0_i32 = arith.constant 0 : i32
    %0 = arith.cmpi eq, %arg1, %c0_i32 : i32
    %1 = arith.extui %0 : i1 to i32
    %c0_i32_0 = arith.constant 0 : i32
    %2 = arith.cmpi ne, %1, %c0_i32_0 : i32
    scf.if %2 {
      %cst_17 = arith.constant 0.000000e+00 : f32
      %32 = vector.broadcast %cst_17 : f32 to vector<1x1xf32>
      %c0_18 = arith.constant 0 : index
      %c0_19 = arith.constant 0 : index
      %33 = vector.load %arg7[%c0_18, %c0_19] : memref<1x1xf32, #tpu.memory_space<vmem>>, vector<1x1xf32>
      tpu.vector_store %arg7[%c0_18, %c0_19], %32 {strides = array<i32>} : memref<1x1xf32, #tpu.memory_space<vmem>>, vector<1x1xf32>,
    } else {
    }
    %c2_i32 = arith.constant 2 : i32
    %3 = arith.muli %arg0, %c2_i32 : i32
    %4 = arith.addi %3, %arg1 : i32
    %c16_i32 = arith.constant 16 : i32
    %5 = arith.muli %4, %c16_i32 : i32
    %c0_i32_1 = arith.constant 0 : i32
    %c16_i32_2 = arith.constant 16 : i32
    %6 = arith.addi %c0_i32_1, %c16_i32_2 : i32
    %c1_i32 = arith.constant 1 : i32
    scf.for %arg8 = %c0_i32_1 to %6 step %c1_i32  : i32 {
      %c1_i32_17 = arith.constant 1 : i32
      %32 = arith.muli %arg8, %c1_i32_17 : i32
      %c0_i32_18 = arith.constant 0 : i32
      %33 = arith.addi %c0_i32_18, %32 : i32
      %34 = arith.addi %5, %33 : i32
      %35 = arith.index_cast %34 : i32 to index
      %36 = memref.load %arg2[%35] : memref<32xi32, #tpu.memory_space<smem>>
      %c0_i32_19 = arith.constant 0 : i32
      %37 = arith.maxsi %36, %c0_i32_19 : i32
      %c15_i32 = arith.constant 15 : i32
      %38 = arith.minsi %37, %c15_i32 : i32
      %39 = arith.index_cast %38 : i32 to index
      %c0_20 = arith.constant 0 : index
      %40 = vector.load %arg4[%39, %c0_20] : memref<16x128xf32, #tpu.memory_space<vmem>>, vector<1x128xf32>
      %41 = arith.index_cast %33 : i32 to index
      %c0_21 = arith.constant 0 : index
      %42 = vector.load %arg6[%41, %c0_21] : memref<16x128xf32, #tpu.memory_space<vmem>>, vector<1x128xf32>
      tpu.vector_store %arg6[%41, %c0_21], %40 {strides = array<i32>} : memref<16x128xf32, #tpu.memory_space<vmem>>, vector<1x128xf32>,
    }
    %c16_i32_3 = arith.constant 16 : i32
    %c0 = arith.constant 0 : index
    %c0_4 = arith.constant 0 : index
    %7 = vector.load %arg3[%c0, %c0_4] : memref<16x128xf32, #tpu.memory_space<vmem>>, vector<16x128xf32>
    %c0_5 = arith.constant 0 : index
    %c0_6 = arith.constant 0 : index
    %8 = vector.load %arg6[%c0_5, %c0_6] : memref<16x128xf32, #tpu.memory_space<vmem>>, vector<16x128xf32>
    %9 = arith.subf %7, %8 : vector<16x128xf32>
    %10 = arith.mulf %9, %9 : vector<16x128xf32>
    %cst = arith.constant dense<0.000000e+00> : vector<16xf32>
    %11 = vector.multi_reduction <add>, %10, %cst [1] : vector<16x128xf32> to vector<16xf32>
    %12 = vector.shape_cast %11 : vector<16xf32> to vector<16x1xf32>
    %cst_7 = arith.constant 9.99999996E-13 : f32
    %cst_8 = arith.constant 9.99999995E+11 : f32
    %13 = vector.broadcast %cst_7 : f32 to vector<16x1xf32>
    %14 = arith.maximumf %13, %12 : vector<16x1xf32>
    %15 = vector.broadcast %cst_8 : f32 to vector<16x1xf32>
    %16 = arith.minimumf %15, %14 : vector<16x1xf32>
    %17 = tpu.iota {dimensions = array<i32: 0>} : vector<16x1xi32>
    %18 = vector.broadcast %5 : i32 to vector<16x1xi32>
    %19 = arith.addi %18, %17 : vector<16x1xi32>
    %c24_i32 = arith.constant 24 : i32
    %20 = vector.broadcast %c24_i32 : i32 to vector<16x1xi32>
    %21 = arith.cmpi slt, %19, %20 : vector<16x1xi32>
    %cst_9 = arith.constant 0.000000e+00 : f32
    %22 = vector.broadcast %cst_9 : f32 to vector<16x1xf32>
    %23 = arith.select %21, %16, %22 : vector<16x1xi1>, vector<16x1xf32>
    %c0_10 = arith.constant 0 : index
    %c0_11 = arith.constant 0 : index
    %24 = vector.load %arg7[%c0_10, %c0_11] : memref<1x1xf32, #tpu.memory_space<vmem>>, vector<1x1xf32>
    %cst_12 = arith.constant dense<0.000000e+00> : vector<1xf32>
    %25 = vector.multi_reduction <add>, %23, %cst_12 [0] : vector<16x1xf32> to vector<1xf32>
    %26 = vector.shape_cast %25 : vector<1xf32> to vector<1x1xf32>
    %27 = arith.addf %24, %26 : vector<1x1xf32>
    %c0_13 = arith.constant 0 : index
    %c0_14 = arith.constant 0 : index
    %28 = vector.load %arg7[%c0_13, %c0_14] : memref<1x1xf32, #tpu.memory_space<vmem>>, vector<1x1xf32>
    tpu.vector_store %arg7[%c0_13, %c0_14], %27 {strides = array<i32>} : memref<1x1xf32, #tpu.memory_space<vmem>>, vector<1x1xf32>,
    %c1_i32_15 = arith.constant 1 : i32
    %29 = arith.cmpi eq, %arg1, %c1_i32_15 : i32
    %30 = arith.extui %29 : i1 to i32
    %c0_i32_16 = arith.constant 0 : i32
    %31 = arith.cmpi ne, %30, %c0_i32_16 : i32
    scf.if %31 {
      %c0_17 = arith.constant 0 : index
      %c0_18 = arith.constant 0 : index
      %32 = vector.load %arg7[%c0_17, %c0_18] : memref<1x1xf32, #tpu.memory_space<vmem>>, vector<1x1xf32>
      %c0_19 = arith.constant 0 : index
      %c0_20 = arith.constant 0 : index
      %33 = vector.load %arg5[%c0_19, %c0_20] : memref<1x1xf32, #tpu.memory_space<vmem>>, vector<1x1xf32>
      tpu.vector_store %arg5[%c0_19, %c0_20], %32 {strides = array<i32>} : memref<1x1xf32, #tpu.memory_space<vmem>>, vector<1x1xf32>,
    } else {
    }
    return
  }
  func.func @transform_0(%arg0: i32, %arg1: i32, %arg2: memref<32xi32, #tpu.memory_space<smem>>) -> (i32, i32) {
    %c2_i32 = arith.constant 2 : i32
    %0 = arith.muli %arg0, %c2_i32 : i32
    %1 = arith.addi %0, %arg1 : i32
    %c0_i32 = arith.constant 0 : i32
    %c0_i32_0 = arith.constant 0 : i32
    return %1, %c0_i32 : i32, i32
  }
  func.func @transform_1(%arg0: i32, %arg1: i32, %arg2: memref<32xi32, #tpu.memory_space<smem>>) -> (i32, i32) {
    %c0_i32 = arith.constant 0 : i32
    %c0_i32_0 = arith.constant 0 : i32
    %c0_i32_1 = arith.constant 0 : i32
    return %c0_i32, %c0_i32_0 : i32, i32
  }
  func.func @transform_2(%arg0: i32, %arg1: i32, %arg2: memref<32xi32, #tpu.memory_space<smem>>) -> (i32, i32) {
    %c0_i32 = arith.constant 0 : i32
    %c0_i32_0 = arith.constant 0 : i32
    return %arg0, %c0_i32 : i32, i32
  }
}

</mosaic_0001>

<llo_original>
// kernel: tpu_custom_call.1
$region0: #{tpu_custom_call.1}
  #allocation0 [shape = 'u32[]', space=smem, size = 0x4, offset = 0x4, fixed_abs, tag = 'smem constant byte address 0x4 - core index']
  #allocation1 [shape = 'u32[144,128]{1,0:T(1,128)}', space=vmem, size = 0x12000, scoped, tag = 'internal scratch']
  #allocation2 [shape = 'f32[16,128]{1,0:T(8,128)}', space=vmem, size = 0x2000, scoped, tag = 'scratch operand']
  #allocation3 [shape = 'f32[1,1]{1,0:T(1,128)}', space=vmem, size = 0x200, scoped, tag = 'scratch operand']
  #allocation4 [shape = 's32[1]{0}', space=sflag, size = 0x4, scoped, tag = 'scoped memory for tpu_custom_call.1']
  #allocation5 [shape = 'u8[512]{0}', space=smem, size = 0x200, scoped, tag = 'prefetched SMEM operand 0']
  %s0 = inlined_call_operand.hbm [shape: s32[32], index: 0, kind: input, shape index: {}]
  %s1 = inlined_call_operand.hbm [shape: f32[32,128], index: 1, kind: input, shape index: {}]
  %s2 = inlined_call_operand.hbm [shape: f32[16,128], index: 2, kind: input, shape index: {}]
  %s3 = inlined_call_operand.hbm [shape: f32[1,1], index: 3, kind: output, shape index: {}]
  %s4 = sld [smem:[#allocation0]]
  $region64: #{tpu_custom_call.1} parent=0
    _
  %s6 = ssub.s32 1, %s4
  %s7 = scalar_select 0, %s6, %s4
  %9 = dma.hbm_to_smem %s0, 16, [#allocation5], [#allocation4]
  %10 = dma.done [#allocation4], 16
  %11 = sfence
  $region1: #{tpu_custom_call.1} parent=0
    #allocation6 [shape = 'u8[16384]{0}', space=vmem, size = 0x4000, scoped, tag = 'input window, operand 1']
    #allocation7 [shape = 's32[2]{0}', space=sflag, size = 0x8, scoped, tag = 'scoped memory for tpu_custom_call.1']
    #allocation8 [shape = 's32[2]{0}', space=sflag, size = 0x8, scoped, tag = 'scoped memory for tpu_custom_call.1']
    #allocation9 [shape = 'u8[8192]{0}', space=vmem, size = 0x2000, scoped, tag = 'input window, operand 2, single buffered']
    #allocation10 [shape = 's32[1]{0}', space=sflag, size = 0x4, scoped, tag = 'scoped memory for tpu_custom_call.1']
    #allocation11 [shape = 'u8[512]{0}', space=vmem, size = 0x400, scoped, tag = 'output window, operand 0, single buffered']
    %12 = vsyncpa [#allocation7], 0
    %s13 = scalar_lea.sflag [#allocation7], 1
    %14 = vsyncpa %s13, 0
    %15 = vsyncpa [#allocation10], 0
    %16 = vsyncpa [#allocation8], 0
    loop: start=0, step=1, limit=4
    $region2: #{tpu_custom_call.1} parent=1 // loop_pre_header
      _
    $region3: #{tpu_custom_call.1} parent=1 // loop_header
      %s18 = sphi 0, %s22
      %p19 = scmp.ge.s32.totalorder %s18, 4
      %s25 = sphi 0, %s37
      %s26 = sphi 0, %s33
      %s27 = sphi 0, %s25
      %s28 = sphi 0, %s26
      %s29 = sphi 0, %s27
      %s30 = sphi 0, %s28
      %s44 = sphi 0, %s46
      %s47 = sphi 0, %s44
      %s48 = sphi 0, %s47
      %s64 = sphi 0, %s48
      %s68 = sphi 0, %s68
      %s70 = sphi 0, %s68
      %s71 = sphi 0, %s70
      %s85 = sphi 0, %s71
      %s91 = sphi 0, %s93
      %s94 = sphi 0, %s91
      %s95 = sphi 0, %s94
      %s111 = sphi 0, %s95
    $region4: #{tpu_custom_call.1} parent=1 // loop_header_branch
      %21 = sbr.rel (%p19) target = $region8
    $region5: #{tpu_custom_call.1} parent=1 // loop_body
      %s23 = ssub.s32 %s18, 1
      %s24 = ssub.s32 %s18, 2
      %s31 = sadd.s32 1, %s26
      %p32 = scmp.ge.s32.totalorder %s31, 2
      %s33 = scalar_select %p32, 0, %s31
      %s34 = sadd.s32 1, %s25
      %s35 = scalar_select %p32, %s34, %s25
      %p36 = scmp.ge.s32.totalorder %s35, 1
      %s37 = scalar_select %p36, 0, %s35
      %s38 = smul.u32 %s25, 2
      %s39 = sadd.s32 %s38, %s26
      %s40 = smul.u32 %s37, 2
      %s41 = sadd.s32 %s40, %s33
      %s42 = ssub.s32 %s39, %s41
      %p43 = scmp.eq.s32.totalorder %s42, 0
      %s45 = sadd.s32 %s44, 1
      %s46 = scalar_select %p43, %s44, %s45
      %p49 = pneg %p43
      %p50 = scmp.eq.s32.totalorder %s18, 1
      %p51 = por %p49, %p50
      %p52 = scmp.ne.s32.totalorder %s44, %s47
      %p53 = scmp.eq.s32.totalorder %s18, 0
      %p54 = por %p52, %p53
      %p55 = scmp.ne.s32.totalorder %s44, %s47
      %p56 = scmp.eq.s32.totalorder %s23, 1
      %p57 = por %p55, %p56
      %p58 = scmp.ne.s32.totalorder %s47, %s48
      %p59 = scmp.eq.s32.totalorder %s23, 0
      %p60 = por %p58, %p59
      %p61 = scmp.ne.s32.totalorder %s47, %s48
      %p62 = scmp.eq.s32.totalorder %s24, 1
      %p63 = por %p61, %p62
      %p65 = scmp.ne.s32.totalorder %s48, %s64
      %p66 = scmp.eq.s32.totalorder %s24, 0
      %p67 = por %p65, %p66
      %s69 = sadd.s32 %s68, 1
      %p72 = scmp.eq.s32.totalorder %s18, 1
      %p73 = scmp.ne.s32.totalorder %s68, %s70
      %p74 = scmp.eq.s32.totalorder %s18, 0
      %p75 = por %p73, %p74
      %p76 = scmp.ne.s32.totalorder %s68, %s70
      %p77 = scmp.eq.s32.totalorder %s23, 1
      %p78 = por %p76, %p77
      %p79 = scmp.ne.s32.totalorder %s70, %s71
      %p80 = scmp.eq.s32.totalorder %s23, 0
      %p81 = por %p79, %p80
      %p82 = scmp.ne.s32.totalorder %s70, %s71
      %p83 = scmp.eq.s32.totalorder %s24, 1
      %p84 = por %p82, %p83
      %p86 = scmp.ne.s32.totalorder %s71, %s85
      %p87 = scmp.eq.s32.totalorder %s24, 0
      %p88 = por %p86, %p87
      %s89 = ssub.s32 %s25, %s37
      %p90 = scmp.eq.s32.totalorder %s89, 0
      %s92 = sadd.s32 %s91, 1
      %s93 = scalar_select %p90, %s91, %s92
      %p96 = pneg %p90
      %p97 = scmp.eq.s32.totalorder %s18, 1
      %p98 = por %p96, %p97
      %p99 = scmp.ne.s32.totalorder %s91, %s94
      %p100 = scmp.eq.s32.totalorder %s18, 0
      %p101 = por %p99, %p100
      %p102 = scmp.ne.s32.totalorder %s91, %s94
      %p103 = scmp.eq.s32.totalorder %s23, 1
      %p104 = por %p102, %p103
      %p105 = scmp.ne.s32.totalorder %s94, %s95
      %p106 = scmp.eq.s32.totalorder %s23, 0
      %p107 = por %p105, %p106
      %p108 = scmp.ne.s32.totalorder %s94, %s95
      %p109 = scmp.eq.s32.totalorder %s24, 1
      %p110 = por %p108, %p109
      %p112 = scmp.ne.s32.totalorder %s95, %s111
      %p113 = scmp.eq.s32.totalorder %s24, 0
      %p114 = por %p112, %p113
      %p115 = scmp.le.s32.totalorder 1, %s18
      %p116 = scmp.lt.s32.totalorder %s18, 3
      %p117 = pnand %p115, %p116
      %p118 = pneg %p117
      // Predicated region
      $region9: #{tpu_custom_call.1} parent=5 // pred_check
        _
      $region10: #{tpu_custom_call.1} parent=5 // pred_check_branch
        %120 = sbr.rel (%p117) target = $region12
      $region11: #{tpu_custom_call.1} parent=5 // pred_region
        %s121 = ssub.s32 %s18, 1
        // Predicated region
        $region13: #{tpu_custom_call.1} parent=11 // pred_check
          %p122 = pneg %p81
        $region14: #{tpu_custom_call.1} parent=11 // pred_check_branch
          %124 = sbr.rel (%p122) target = $region16
        $region15: #{tpu_custom_call.1} parent=11 // pred_region
          %s126 = ssub.s32 256, 256
          %127 = vsyncadd [#allocation10], %s126
          %s128 = sshll.u32 [#allocation9], 4
          %s129 = int_to_ptr.vmem [resolvable:$true] %s128
          %134 = dma.hbm_to_vmem [thread:$0]  %s2, 256, %s129, [#allocation10], 128, 128, 8
        $region16: #{tpu_custom_call.1} parent=11 // pred_fallthru
          _
      $region12: #{tpu_custom_call.1} parent=5 // pred_fallthru
        _
      %p135 = scmp.lt.s32.totalorder %s18, 2
      // Predicated region
      $region17: #{tpu_custom_call.1} parent=5 // pred_check
        %p136 = pneg %p135
      $region18: #{tpu_custom_call.1} parent=5 // pred_check_branch
        %138 = sbr.rel (%p136) target = $region20
      $region19: #{tpu_custom_call.1} parent=5 // pred_region
        // Predicated region
        $region21: #{tpu_custom_call.1} parent=19 // pred_check
          %p139 = pneg %p54
        $region22: #{tpu_custom_call.1} parent=19 // pred_check_branch
          %141 = sbr.rel (%p139) target = $region24
        $region23: #{tpu_custom_call.1} parent=19 // pred_region
          %s142 = sand.u32 %s44, 1
          %s143 = scalar_lea.sflag [#allocation7], %s142
          %s144 = sand.u32 %s44, 1
          %s145 = smul.addr %s144, 16
          %s146 = scalar_lea.vmem [#allocation6], %s145
          %s147 = smul.u32 %s25, 2
          %s148 = sadd.s32 %s147, %s26
          %s149 = smul.u32 2, %s148
          %s151 = ssub.s32 256, 256
          %152 = vsyncadd %s143, %s151
          %s153 = smul.addr %s149, 128
          %s154 = scalar_lea.hbm %s1, %s153
          %s155 = sshll.u32 %s146, 4
          %s156 = int_to_ptr.vmem [resolvable:$true] %s155
          %161 = dma.hbm_to_vmem [thread:$0]  %s154, 256, %s156, %s143, 128, 128, 8
        $region24: #{tpu_custom_call.1} parent=19 // pred_fallthru
          _
      $region20: #{tpu_custom_call.1} parent=5 // pred_fallthru
        _
      %p162 = scmp.le.s32.totalorder 1, %s18
      %p163 = scmp.lt.s32.totalorder %s18, 3
      %p164 = pnand %p162, %p163
      %p165 = pneg %p164
      // Predicated region
      $region25: #{tpu_custom_call.1} parent=5 // pred_check
        _
      $region26: #{tpu_custom_call.1} parent=5 // pred_check_branch
        %167 = sbr.rel (%p164) target = $region28
      $region27: #{tpu_custom_call.1} parent=5 // pred_region
        %s168 = ssub.s32 %s18, 1
        %s169 = sand.u32 %s47, 1
        %s170 = scalar_lea.sflag [#allocation7], %s169
        %s171 = sand.u32 %s47, 1
        %s172 = smul.addr %s171, 16
        %s173 = scalar_lea.vmem [#allocation6], %s172
        // Predicated region
        $region29: #{tpu_custom_call.1} parent=27 // pred_check
          %p174 = pneg %p60
        $region30: #{tpu_custom_call.1} parent=27 // pred_check_branch
          %176 = sbr.rel (%p174) target = $region32
        $region31: #{tpu_custom_call.1} parent=27 // pred_region
          %177 = dma.done %s170, 256
        $region32: #{tpu_custom_call.1} parent=27 // pred_fallthru
          _
        // Predicated region
        $region33: #{tpu_custom_call.1} parent=27 // pred_check
          %p178 = pneg %p81
        $region34: #{tpu_custom_call.1} parent=27 // pred_check_branch
          %180 = sbr.rel (%p178) target = $region36
        $region35: #{tpu_custom_call.1} parent=27 // pred_region
          %181 = dma.done [#allocation10], 256
        $region36: #{tpu_custom_call.1} parent=27 // pred_fallthru
          _
        %s182 = sand.u32 %s47, 1
        %s183 = scalar_lea.sflag [#allocation7], %s182
        %s184 = sand.u32 %s47, 1
        %s185 = smul.addr %s184, 16
        %s186 = scalar_lea.vmem [#allocation6], %s185
        %p187 = pneg %p60
        %p188 = pneg %p57
        %p189 = pneg %p81
        %p190 = pneg %p78
        %p191 = pneg %p107
        %p192 = pneg %p104
        %s193 = smul.u32 %s27, 2
        %s194 = sadd.s32 %s193, %s28
        %s195 = smul.u32 2, %s194
        %p196 = scmp.eq.s32.totalorder %s28, 0
        // Predicated region
        $region37: #{tpu_custom_call.1} parent=27 // pred_check
          %p197 = pneg %p196
        $region38: #{tpu_custom_call.1} parent=27 // pred_check_branch
          %199 = sbr.rel (%p197) target = $region40
        $region39: #{tpu_custom_call.1} parent=27 // pred_region
          %vm200 = vcmask 0
          %201 = vst.msk [vmem:[#allocation3] sm:$0x1] %vm200, 0.0
        $region40: #{tpu_custom_call.1} parent=27 // pred_fallthru
          _
        %s202 = smul.u32 %s27, 2
        %s203 = sadd.s32 %s202, %s28
        %s204 = smul.u32 %s203, 16
        loop: start=0, step=1, limit=16
        $region41: #{tpu_custom_call.1} parent=27 // loop_pre_header
          _
        $region42: #{tpu_custom_call.1} parent=27 // loop_header
          %s206 = sphi 0, %s210
          %p207 = scmp.ge.s32.totalorder %s206, 16
        $region43: #{tpu_custom_call.1} parent=27 // loop_header_branch
          %209 = sbr.rel (%p207) target = $region47
        $region44: #{tpu_custom_call.1} parent=27 // loop_body
          %s211 = sadd.s32 %s204, %s206
          %s212 = sld [smem:[#allocation5 + %s211]]
          %p213 = scmp.gt.s32.totalorder %s212, 0
          %s214 = scalar_select %p213, %s212, 0
          %p215 = scmp.lt.s32.totalorder %s214, 15
          %s216 = scalar_select %p215, %s214, 15
          %s217 = scalar_lea.vmem [#allocation9], %s216
          %v218 = vld [vmem:[%s217] sm:$0x1]
          %s219 = scalar_lea.vmem [#allocation2], %s206
          %220 = vst [vmem:[%s219] sm:$0x1] %v218
        $region45: #{tpu_custom_call.1} parent=27 // loop_footer
          %s210 = sadd.s32 1, %s206
        $region46: #{tpu_custom_call.1} parent=27 // loop_footer_branch
          %205 = sbr.rel target = $region42
        $region47: #{tpu_custom_call.1} parent=27 // loop_exit
          _
        %v221 = vld [vmem:[%s173] sm:$0xff]
        %v222 = vld [vmem:[%s173 + $0x8] sm:$0xff]
        %v223 = vld [vmem:[#allocation2] sm:$0xff]
        %v224 = vld [vmem:[#allocation2 + $0x8] sm:$0xff]
        %v225 = vsub.f32 %v221, %v223
        %v226 = vsub.f32 %v222, %v224
        %v227 = vmul.f32 %v225, %v225
        %v228 = vmul.f32 %v226, %v226
        %229 = vadd.xlane.f32.xlu0 %v227
        %v230 = vpop.xlane.xlu0 %229
        %231 = vadd.xlane.f32.xlu0 %v228
        %v232 = vpop.xlane.xlu0 %231
        %v233 = vmax.f32 %v230, 1e-12
        %v234 = vmax.f32 %v232, 1e-12
        %v235 = vmin.f32 %v233, 1e+12
        %v236 = vmin.f32 %v234, 1e+12
        %v237 = vlaneseq
        %v238 = vshrl.u32 %v237, 7
        %v239 = vadd.s32 %v238, 8
        %v240 = vstv %s204
        %v241 = vadd.s32 %v240, %v238
        %v242 = vadd.s32 %v240, %v239
        %vm243 = vcmp.lt.s32.totalorder %v241, 24
        %vm244 = vcmp.lt.s32.totalorder %v242, 24
        %v245 = vsel %vm243, %v235, 0.0
        %v246 = vsel %vm244, %v236, 0.0
        %v247 = vld [vmem:[#allocation3] sm:$0x1]
        %v248 = vadd.f32 %v245, %v246
        %v249 = vrot.slane %v248, 4
        %v250 = vadd.f32 %v248, %v249
        %v251 = vrot.slane %v250, 2
        %v252 = vadd.f32 %v250, %v251
        %v253 = vrot.slane %v252, 1
        %v254 = vadd.f32 %v252, %v253
        %v255 = vadd.f32 %v247, %v254
        %vm256 = vcmask 0
        %257 = vst.msk [vmem:[#allocation3] sm:$0x1] %vm256, %v255
        %p258 = scmp.eq.s32.totalorder %s28, 1
        // Predicated region
        $region48: #{tpu_custom_call.1} parent=27 // pred_check
          %p259 = pneg %p258
        $region49: #{tpu_custom_call.1} parent=27 // pred_check_branch
          %261 = sbr.rel (%p259) target = $region51
        $region50: #{tpu_custom_call.1} parent=27 // pred_region
          %v262 = vld [vmem:[#allocation3] sm:$0x1]
          %263 = vst.msk [vmem:[#allocation11] sm:$0x1] %vm256, %v262
        $region51: #{tpu_custom_call.1} parent=27 // pred_fallthru
          _
        // Predicated region
        $region52: #{tpu_custom_call.1} parent=27 // pred_check
          %p264 = pneg %p104
        $region53: #{tpu_custom_call.1} parent=27 // pred_check_branch
          %266 = sbr.rel (%p264) target = $region55
        $region54: #{tpu_custom_call.1} parent=27 // pred_region
          %s268 = ssub.s32 16, 16
          %269 = vsyncadd [#allocation8], %s268
          %s270 = smul.addr %s27, 16
          %s271 = scalar_lea.hbm %s3, %s270
          %s273 = sshll.u32 [#allocation11], 4
          %s274 = int_to_ptr.vmem [resolvable:$true] %s273
          %276 = dma.vmem_to_hbm [thread:$0]  %s274, 16, %s271, [#allocation8]
        $region55: #{tpu_custom_call.1} parent=27 // pred_fallthru
          _
        // Predicated region
        $region56: #{tpu_custom_call.1} parent=27 // pred_check
          %p277 = pneg %p104
        $region57: #{tpu_custom_call.1} parent=27 // pred_check_branch
          %279 = sbr.rel (%p277) target = $region59
        $region58: #{tpu_custom_call.1} parent=27 // pred_region
          %280 = dma.done [#allocation8], 16
        $region59: #{tpu_custom_call.1} parent=27 // pred_fallthru
          _
      $region28: #{tpu_custom_call.1} parent=5 // pred_fallthru
        _
      %p281 = scmp.le.s32.totalorder 2, %s18
      // Predicated region
      $region60: #{tpu_custom_call.1} parent=5 // pred_check
        %p282 = pneg %p281
      $region61: #{tpu_custom_call.1} parent=5 // pred_check_branch
        %284 = sbr.rel (%p282) target = $region63
      $region62: #{tpu_custom_call.1} parent=5 // pred_region
        %s285 = ssub.s32 %s18, 2
      $region63: #{tpu_custom_call.1} parent=5 // pred_fallthru
        _
    $region6: #{tpu_custom_call.1} parent=1 // loop_footer
      %s22 = sadd.s32 1, %s18
    $region7: #{tpu_custom_call.1} parent=1 // loop_footer_branch
      %17 = sbr.rel target = $region3
    $region8: #{tpu_custom_call.1} parent=1 // loop_exit
      _
    %286 = vsyncpa [#allocation7], 1
    %s287 = scalar_lea.sflag [#allocation7], 1
    %288 = vsyncpa %s287, 1
    %289 = vsyncpa [#allocation10], 1
    %290 = vsyncpa [#allocation8], 1
    %s291 = scalar_lea.sflag [#allocation8], 1
    %292 = vsyncpa %s291, 1

</llo_original>
